<compile_context>
chip_gen: v7x
topology: tpu7x:2x2x1
jax: 0.10.0
libtpu: 0.0.40
codegen_flags: <defaults>
</compile_context>

<pallas_src>
import functools
import math

import jax
import jax.numpy as jnp
from jax.experimental import pallas as pl
from jax.experimental.pallas import tpu as pltpu

_VMEM_LIMIT = 48 * 1024 * 1024  # conservative across v5e/v6e/v7x (v7x: 64 MiB phys)


# ----------------------------- kernels --------------------------------------

def ln_matmul_kernel(x_ref, gamma_ref, beta_ref, w_ref, bias_ref, o_ref, h_sc,
                     *, eps):
    """out[m,n] tile of (LayerNorm(x) @ W + b).

    Grid = (M_tiles, N_tiles), N innermost.  LN of the current M tile is
    computed once at n == 0 (used directly, stored to h_sc for later N tiles).
    """
    n = pl.program_id(1)

    def matmul(h):
        y = jnp.dot(h, w_ref[...], preferred_element_type=jnp.float32)
        y = y + bias_ref[...].astype(jnp.float32)
        o_ref[...] = y.astype(o_ref.dtype)

    @pl.when(n == 0)
    def _():
        x = x_ref[...].astype(jnp.float32)
        mu = jnp.mean(x, axis=-1, keepdims=True)
        var = jnp.mean(jnp.square(x - mu), axis=-1, keepdims=True)
        h = (x - mu) * jax.lax.rsqrt(var + eps)
        h = h * gamma_ref[...].astype(jnp.float32) + beta_ref[...].astype(jnp.float32)
        h = h.astype(h_sc.dtype)
        h_sc[...] = h
        matmul(h)                      # fresh value; no store->load round trip

    @pl.when(n != 0)
    def _():
        matmul(h_sc[...])


def matmul_res_kernel(x_ref, w_ref, bias_ref, res_ref, o_ref):
    """out[m,n] tile of (x @ W + b + residual)."""
    y = jnp.dot(x_ref[...], w_ref[...], preferred_element_type=jnp.float32)
    y = y + bias_ref[...].astype(jnp.float32) + res_ref[...].astype(jnp.float32)
    o_ref[...] = y.astype(o_ref.dtype)


def mlp_block_kernel(x_ref, g_ref, b_ref, fcw_ref, fcb_ref, pw_ref, pb_ref,
                     o_ref, *, eps):
    """Fused ln2 -> fc -> tanh-GELU -> proj -> +residual for one M tile."""
    x = x_ref[...].astype(jnp.float32)
    mu = jnp.mean(x, axis=-1, keepdims=True)
    var = jnp.mean(jnp.square(x - mu), axis=-1, keepdims=True)
    h = (x - mu) * jax.lax.rsqrt(var + eps)
    h = (h * g_ref[...].astype(jnp.float32)
         + b_ref[...].astype(jnp.float32)).astype(jnp.bfloat16)
    mid = jnp.dot(h, fcw_ref[...], preferred_element_type=jnp.float32)
    mid = mid + fcb_ref[...].astype(jnp.float32)
    # tanh-approximate GELU (GPT-2 / nanoGPT convention).
    # TODO(synk): if the reference uses exact-erf nn.GELU(), swap to jax.lax.erf.
    mid = 0.5 * mid * (1.0 + jnp.tanh(0.7978845608028654
                                      * (mid + 0.044715 * mid * mid * mid)))
    y = jnp.dot(mid.astype(jnp.bfloat16), pw_ref[...],
                preferred_element_type=jnp.float32)
    y = y + pb_ref[...].astype(jnp.float32) + x           # residual add in f32
    o_ref[...] = y.astype(o_ref.dtype)


def flash_attn_kernel(q_ref, k_ref, v_ref, o_ref, m_sc, l_sc, acc_sc,
                      *, scale, hpg, hd):
    """Causal flash attention over a head group.

    Grid = (B, head_groups, q_tiles, kv_tiles), kv innermost.  q/k/v refs are
    (tq|tkv, hpg*hd) lane-dense slices taken directly from the fused qkv
    activation; the output tile is written straight into the (B*T, C) buffer.
    """
    qi = pl.program_id(2)
    ki = pl.program_id(3)
    tq = q_ref.shape[0]
    tkv = k_ref.shape[0]

    @pl.when(ki == 0)
    def _():
        m_sc[...] = jnp.full(m_sc.shape, -1e30, m_sc.dtype)
        l_sc[...] = jnp.zeros(l_sc.shape, l_sc.dtype)
        acc_sc[...] = jnp.zeros(acc_sc.shape, acc_sc.dtype)

    # tq == tkv: dead tiles are exactly ki > qi (their K/V DMA is also skipped
    # by the clamped index_map in the wrapper).
    @pl.when(ki <= qi)
    def _():
        row = qi * tq + jax.lax.broadcasted_iota(jnp.int32, (tq, tkv), 0)
        col = ki * tkv + jax.lax.broadcasted_iota(jnp.int32, (tq, tkv), 1)
        mask = col <= row
        for hh in range(hpg):                         # static loop over heads
            q = q_ref[:, hh * hd:(hh + 1) * hd]
            k = k_ref[:, hh * hd:(hh + 1) * hd]
            v = v_ref[:, hh * hd:(hh + 1) * hd]
            s = jax.lax.dot_general(q, k, (((1,), (1,)), ((), ())),
                                    preferred_element_type=jnp.float32) * scale
            s = jnp.where(mask, s, -1e30)
            m_prev = m_sc[hh]                                       # (tq, 1)
            m_new = jnp.maximum(m_prev, jnp.max(s, axis=-1, keepdims=True))
            alpha = jnp.exp(m_prev - m_new)
            p = jnp.exp(s - m_new)
            l_sc[hh] = alpha * l_sc[hh] + jnp.sum(p, axis=-1, keepdims=True)
            acc_sc[hh] = alpha * acc_sc[hh] + jax.lax.dot_general(
                p.astype(v.dtype), v, (((1,), (0,)), ((), ())),
                preferred_element_type=jnp.float32)
            m_sc[hh] = m_new

    @pl.when(ki == pl.num_programs(3) - 1)
    def _():
        for hh in range(hpg):
            inv_l = 1.0 / l_sc[hh]          # exact divide on the output path
            o_ref[:, hh * hd:(hh + 1) * hd] = (acc_sc[hh] * inv_l).astype(o_ref.dtype)


def lm_head_kernel(x_ref, gamma_ref, beta_ref, w_ref, tgt_ref,
                   logits_ref, lse_ref, tl_ref,
                   h_sc, m_sc, l_sc, t_sc, *, eps, vocab_size, tv):
    """Final LN + tied lm_head (+ fused online logsumexp / target-logit gather).

    Grid = (M_tiles, V_tiles), vocab innermost.  The tied wte (V, C) is used
    directly via a transposed contraction; no bias.  Per row it emits the
    full f32 logits tile plus (lse, target_logit) so the loss needs no extra
    pass over the logits.
    """
    n = pl.program_id(1)

    def body(h):
        y = jax.lax.dot_general(h, w_ref[...], (((1,), (1,)), ((), ())),
                                preferred_element_type=jnp.float32)
        logits_ref[...] = y
        col = n * tv + jax.lax.broadcasted_iota(jnp.int32, y.shape, 1)
        valid = col < vocab_size                        # mask padded vocab cols
        ym = jnp.where(valid, y, -1e30)
        m_prev = m_sc[...]
        m_new = jnp.maximum(m_prev, jnp.max(ym, axis=-1, keepdims=True))
        alpha = jnp.exp(m_prev - m_new)
        l_sc[...] = alpha * l_sc[...] + jnp.sum(jnp.exp(ym - m_new),
                                                axis=-1, keepdims=True)
        m_sc[...] = m_new
        hit = (col == tgt_ref[...]) & valid
        t_sc[...] = t_sc[...] + jnp.sum(jnp.where(hit, y, 0.0),
                                        axis=-1, keepdims=True)

    @pl.when(n == 0)
    def _():
        x = x_ref[...].astype(jnp.float32)
        mu = jnp.mean(x, axis=-1, keepdims=True)
        var = jnp.mean(jnp.square(x - mu), axis=-1, keepdims=True)
        h = (x - mu) * jax.lax.rsqrt(var + eps)
        h = (h * gamma_ref[...].astype(jnp.float32)
             + beta_ref[...].astype(jnp.float32)).astype(h_sc.dtype)
        h_sc[...] = h
        m_sc[...] = jnp.full(m_sc.shape, -1e30, m_sc.dtype)
        l_sc[...] = jnp.zeros(l_sc.shape, l_sc.dtype)
        t_sc[...] = jnp.zeros(t_sc.shape, t_sc.dtype)
        body(h)

    @pl.when(n != 0)
    def _():
        body(h_sc[...])

    @pl.when(n == pl.num_programs(1) - 1)
    def _():
        lse_ref[...] = m_sc[...] + jnp.log(l_sc[...])
        tl_ref[...] = t_sc[...]


# ----------------------------- wrappers --------------------------------------

def _pick_tile(dim, target, align):
    if dim <= target:
        return dim                        # full dim (always legal)
    return max(align, (target // align) * align)


def _ln_matmul(x, gamma, beta, w, bias, *, tm=512, tn=512):
    M, K = x.shape
    N = w.shape[1]
    tm = _pick_tile(M, tm, 16)
    tn = _pick_tile(N, tn, 128)
    grid = (pl.cdiv(M, tm), pl.cdiv(N, tn))
    return pl.pallas_call(
        functools.partial(ln_matmul_kernel, eps=1e-5),
        out_shape=jax.ShapeDtypeStruct((M, N), x.dtype),
        grid_spec=pltpu.PrefetchScalarGridSpec(
            num_scalar_prefetch=0,
            grid=grid,
            in_specs=[
                pl.BlockSpec((tm, K), lambda m, n: (m, 0)),   # x (row tile)
                pl.BlockSpec((1, K), lambda m, n: (0, 0)),    # LN gamma
                pl.BlockSpec((1, K), lambda m, n: (0, 0)),    # LN beta
                pl.BlockSpec((K, tn), lambda m, n: (0, n)),   # weight (N tile)
                pl.BlockSpec((1, tn), lambda m, n: (0, n)),   # bias (N tile)
            ],
            out_specs=pl.BlockSpec((tm, tn), lambda m, n: (m, n)),
            scratch_shapes=[pltpu.VMEM((tm, K), jnp.bfloat16)],
        ),
        compiler_params=pltpu.CompilerParams(
            dimension_semantics=("parallel", "arbitrary"),
            vmem_limit_bytes=_VMEM_LIMIT),
    )(x, gamma, beta, w, bias)


def _matmul_residual(x, w, bias, res, *, tm=512, tn=512):
    M, K = x.shape
    N = w.shape[1]
    tm = _pick_tile(M, tm, 16)
    tn = _pick_tile(N, tn, 128)
    grid = (pl.cdiv(M, tm), pl.cdiv(N, tn))
    return pl.pallas_call(
        matmul_res_kernel,
        out_shape=jax.ShapeDtypeStruct((M, N), res.dtype),
        grid_spec=pltpu.PrefetchScalarGridSpec(
            num_scalar_prefetch=0,
            grid=grid,
            in_specs=[
                pl.BlockSpec((tm, K), lambda m, n: (m, 0)),
                pl.BlockSpec((K, tn), lambda m, n: (0, n)),
                pl.BlockSpec((1, tn), lambda m, n: (0, n)),
                pl.BlockSpec((tm, tn), lambda m, n: (m, n)),
            ],
            out_specs=pl.BlockSpec((tm, tn), lambda m, n: (m, n)),
        ),
        compiler_params=pltpu.CompilerParams(
            dimension_semantics=("parallel", "parallel"),
            vmem_limit_bytes=_VMEM_LIMIT),
    )(x, w, bias, res)


def _mlp_block(x, gamma, beta, fc_w, fc_b, proj_w, proj_b, *, tm=512):
    M, C = x.shape
    D4 = fc_w.shape[1]
    tm = _pick_tile(M, tm, 16)
    grid = (pl.cdiv(M, tm),)
    return pl.pallas_call(
        functools.partial(mlp_block_kernel, eps=1e-5),
        out_shape=jax.ShapeDtypeStruct((M, C), x.dtype),
        grid_spec=pltpu.PrefetchScalarGridSpec(
            num_scalar_prefetch=0,
            grid=grid,
            in_specs=[
                pl.BlockSpec((tm, C), lambda m: (m, 0)),
                pl.BlockSpec((1, C), lambda m: (0, 0)),
                pl.BlockSpec((1, C), lambda m: (0, 0)),
                pl.BlockSpec((C, D4), lambda m: (0, 0)),
                pl.BlockSpec((1, D4), lambda m: (0, 0)),
                pl.BlockSpec((D4, C), lambda m: (0, 0)),
                pl.BlockSpec((1, C), lambda m: (0, 0)),
            ],
            out_specs=pl.BlockSpec((tm, C), lambda m: (m, 0)),
        ),
        compiler_params=pltpu.CompilerParams(
            dimension_semantics=("parallel",),
            vmem_limit_bytes=_VMEM_LIMIT),
    )(x, gamma, beta, fc_w, fc_b, proj_w, proj_b)


def _flash_attention(qkv, B, T, H, *, tq=512):
    """qkv: (B*T, 3C) fused projection; returns (B*T, C) attention output."""
    M, threeC = qkv.shape
    C = threeC // 3
    hd = C // H
    scale = 1.0 / math.sqrt(hd)

    # Head grouping so the per-program column width is a 128-lane multiple.
    assert 128 % hd == 0 or hd % 128 == 0, \
        "TODO(synk): support head dims that do not divide/contain 128"
    hpg = (128 // hd) if hd < 128 else 1
    if H % hpg != 0:
        hpg = 1     # TODO(synk): odd head counts (gpt2-xl) fall back to 1 head/program
    gw = hpg * hd
    assert C % gw == 0
    G = H // hpg

    assert T % 8 == 0, "TODO(synk): pad the sequence to a multiple of 8"
    tq = math.gcd(min(tq, T), T)          # tq | T so batches align to tiles
    assert tq % 8 == 0
    tkv = tq                              # required by clamping + mask-init safety
    nq = T // tq

    grid = (B, G, nq, nq)
    kern = functools.partial(flash_attn_kernel, scale=scale, hpg=hpg, hd=hd)
    return pl.pallas_call(
        kern,
        out_shape=jax.ShapeDtypeStruct((M, C), qkv.dtype),
        grid_spec=pltpu.PrefetchScalarGridSpec(
            num_scalar_prefetch=0,
            grid=grid,
            in_specs=[
                # Q slice of the fused qkv buffer.
                pl.BlockSpec((tq, gw),
                             lambda b, g, qi, ki: (b * nq + qi, g)),
                # K/V slices; clamp ki to qi so causally-dead tiles are never DMA'd.
                pl.BlockSpec((tkv, gw),
                             lambda b, g, qi, ki: (b * nq + jnp.minimum(ki, qi),
                                                   (C // gw) + g)),
                pl.BlockSpec((tkv, gw),
                             lambda b, g, qi, ki: (b * nq + jnp.minimum(ki, qi),
                                                   2 * (C // gw) + g)),
            ],
            out_specs=pl.BlockSpec((tq, gw),
                                   lambda b, g, qi, ki: (b * nq + qi, g)),
            scratch_shapes=[
                pltpu.VMEM((hpg, tq, 1), jnp.float32),    # running max m
                pltpu.VMEM((hpg, tq, 1), jnp.float32),    # running denom l
                pltpu.VMEM((hpg, tq, hd), jnp.float32),   # output accumulator
            ],
        ),
        compiler_params=pltpu.CompilerParams(
            dimension_semantics=("parallel", "parallel", "parallel", "arbitrary")),
    )(qkv, qkv, qkv)


def _lm_head(x, gamma, beta, wte, tgt, *, tm=512, tv=1024):
    """Returns (logits f32 (M,V), lse (M,1), target_logit (M,1))."""
    M, C = x.shape
    V = wte.shape[0]
    tm = _pick_tile(M, tm, 16)
    tv = _pick_tile(V, tv, 128)
    grid = (pl.cdiv(M, tm), pl.cdiv(V, tv))
    # TODO(synk): for very large M, swap to vocab-outer / M-inner ordering so the
    # tied wte tile stays resident across the M sweep instead of per-M-tile restream.
    kern = functools.partial(lm_head_kernel, eps=1e-5, vocab_size=V, tv=tv)
    return pl.pallas_call(
        kern,
        out_shape=(jax.ShapeDtypeStruct((M, V), jnp.float32),
                   jax.ShapeDtypeStruct((M, 1), jnp.float32),
                   jax.ShapeDtypeStruct((M, 1), jnp.float32)),
        grid_spec=pltpu.PrefetchScalarGridSpec(
            num_scalar_prefetch=0,
            grid=grid,
            in_specs=[
                pl.BlockSpec((tm, C), lambda m, n: (m, 0)),   # x
                pl.BlockSpec((1, C), lambda m, n: (0, 0)),    # lnf gamma
                pl.BlockSpec((1, C), lambda m, n: (0, 0)),    # lnf beta
                pl.BlockSpec((tv, C), lambda m, n: (n, 0)),   # tied wte (V,C), vocab tile
                pl.BlockSpec((tm, 1), lambda m, n: (m, 0)),   # targets
            ],
            out_specs=[
                pl.BlockSpec((tm, tv), lambda m, n: (m, n)),  # logits
                pl.BlockSpec((tm, 1), lambda m, n: (m, 0)),   # lse
                pl.BlockSpec((tm, 1), lambda m, n: (m, 0)),   # target logit
            ],
            scratch_shapes=[
                pltpu.VMEM((tm, C), jnp.bfloat16),            # LN(x) reuse
                pltpu.VMEM((tm, 1), jnp.float32),             # running max
                pltpu.VMEM((tm, 1), jnp.float32),             # running sum
                pltpu.VMEM((tm, 1), jnp.float32),             # target logit
            ],
        ),
        compiler_params=pltpu.CompilerParams(
            dimension_semantics=("parallel", "arbitrary"),
            vmem_limit_bytes=_VMEM_LIMIT),
    )(x, gamma, beta, wte, tgt)


# ----------------------------- model forward ---------------------------------

def gpt_forward(idx, params, config, targets=None):
    """Equivalent of GPT.forward(idx, targets). Returns (logits, loss)."""
    B, T = idx.shape
    C = config["n_embd"]
    H = config["n_head"]
    V = config["vocab_size"]
    assert T <= config["block_size"]

    tok = jnp.take(params["wte"], idx, axis=0)                  # (B,T,C) glue gather
    pos = params["wpe"][:T]
    x = (tok.astype(jnp.float32) + pos.astype(jnp.float32)[None]).astype(jnp.bfloat16)
    x = x.reshape(B * T, C)

    for lp in params["blocks"]:
        # ln1 -> fused QKV projection, (B*T, 3C)
        qkv = _ln_matmul(x, lp["ln1_w"], lp["ln1_b"], lp["attn_w"], lp["attn_b"])
        # flash attention reads qkv / writes (B*T, C) directly — no split/transpose glue
        y = _flash_attention(qkv, B, T, H)
        # attention output projection + residual
        x = _matmul_residual(y, lp["attn_proj_w"], lp["attn_proj_b"], x)
        # fused ln2 -> fc -> GELU -> proj -> +residual (4C intermediate stays in VMEM)
        x = _mlp_block(x, lp["ln2_w"], lp["ln2_b"], lp["fc_w"], lp["fc_b"],
                       lp["mlp_proj_w"], lp["mlp_proj_b"])

    if targets is not None:
        tgt = targets.reshape(-1, 1).astype(jnp.int32)
    else:
        tgt = jnp.zeros((B * T, 1), jnp.int32)
    logits, lse, tgt_logit = _lm_head(x, params["lnf_w"], params["lnf_b"],
                                      params["wte"], tgt)
    logits = logits.reshape(B, T, V)

    loss = None
    if targets is not None:
        loss = jnp.mean(lse - tgt_logit)     # cross entropy from fused lse/gather
    return logits, loss


# ----------------------------- parameter init --------------------------------

def init_params(key, config):
    V, C = config["vocab_size"], config["n_embd"]
    L = config["n_layer"]
    BS = config["block_size"]
    std = 0.02
    proj_std = 0.02 * (2 * L) ** (-0.5)      # FISCHGPT_SCALE_INIT on c_proj layers

    keys = iter(jax.random.split(key, 2 + 4 * L))

    def nrm(k, shape, s):
        # matmul weights stored (in, out) in bf16; accumulation is f32 in-kernel
        return (s * jax.random.normal(k, shape, dtype=jnp.float32)).astype(jnp.bfloat16)

    wte = nrm(next(keys), (V, C), std)       # tied with lm_head (used directly)
    wpe = nrm(next(keys), (BS, C), std)

    blocks = []
    for _ in range(L):
        blocks.append(dict(
            ln1_w=jnp.ones((1, C), jnp.float32),
            ln1_b=jnp.zeros((1, C), jnp.float32),
            attn_w=nrm(next(keys), (C, 3 * C), std),
            attn_b=jnp.zeros((1, 3 * C), jnp.float32),
            attn_proj_w=nrm(next(keys), (C, C), proj_std),
            attn_proj_b=jnp.zeros((1, C), jnp.float32),
            ln2_w=jnp.ones((1, C), jnp.float32),
            ln2_b=jnp.zeros((1, C), jnp.float32),
            fc_w=nrm(next(keys), (C, 4 * C), std),
            fc_b=jnp.zeros((1, 4 * C), jnp.float32),
            mlp_proj_w=nrm(next(keys), (4 * C, C), proj_std),
            mlp_proj_b=jnp.zeros((1, C), jnp.float32),
        ))

    return dict(
        wte=wte,
        wpe=wpe,
        blocks=blocks,
        lnf_w=jnp.ones((1, C), jnp.float32),
        lnf_b=jnp.zeros((1, C), jnp.float32),
    )


# ----------------------------- main -------------------------------------------

if __name__ == "__main__":
    # Small config (hd=64 like GPT-2, so the lane-dense head-group path is exercised).
    config = dict(vocab_size=128, block_size=16, n_layer=2, n_head=2, n_embd=128)
    B, T = 2, 8

    key = jax.random.PRNGKey(0)
    kparam, kidx, ktgt = jax.random.split(key, 3)
    params = init_params(kparam, config)

    idx = jax.random.randint(kidx, (B, T), 0, config["vocab_size"], dtype=jnp.int32)
    targets = jax.random.randint(ktgt, (B, T), 0, config["vocab_size"], dtype=jnp.int32)

    logits, loss = gpt_forward(idx, params, config, targets=targets)
    jax.block_until_ready(logits)
    jax.block_until_ready(loss)

    assert logits.shape == (B, T, config["vocab_size"])
    assert bool(jnp.all(jnp.isfinite(logits)))
    assert bool(jnp.isfinite(loss))
    print("KERNEL_OK")
</pallas_src>

<mosaic_0001>
module attributes {stable_mosaic.version = 11 : i64} {
  func.func @ln_matmul_kernel(%arg0: i32, %arg1: i32, %arg2: memref<16x128xbf16, #tpu.memory_space<vmem>>, %arg3: memref<1x128xf32, #tpu.memory_space<vmem>>, %arg4: memref<1x128xf32, #tpu.memory_space<vmem>>, %arg5: memref<128x384xbf16, #tpu.memory_space<vmem>>, %arg6: memref<1x384xf32, #tpu.memory_space<vmem>>, %arg7: memref<16x384xbf16, #tpu.memory_space<vmem>>, %arg8: memref<16x128xbf16, #tpu.memory_space<vmem>>) attributes {dimension_semantics = [#tpu.dimension_semantics<parallel>, #tpu.dimension_semantics<arbitrary>], iteration_bounds = array<i64: 1, 1>, scalar_prefetch = 0 : i64, scratch_operands = 1 : i64, tpu.core_type = #tpu.core_type<tc>, window_params = [{transform_indices = @transform_0, window_bounds = array<i64: 16, 128>}, {pipeline_mode = #tpu.pipeline_mode<synchronous>, transform_indices = @transform_1, window_bounds = array<i64: 1, 128>}, {pipeline_mode = #tpu.pipeline_mode<synchronous>, transform_indices = @transform_2, window_bounds = array<i64: 1, 128>}, {transform_indices = @transform_3, window_bounds = array<i64: 128, 384>}, {transform_indices = @transform_4, window_bounds = array<i64: 1, 384>}, {transform_indices = @transform_5, window_bounds = array<i64: 16, 384>}]} {
    %c0_i32 = arith.constant 0 : i32
    %0 = arith.cmpi eq, %arg1, %c0_i32 : i32
    %1 = arith.extui %0 : i1 to i32
    %c0_i32_0 = arith.constant 0 : i32
    %2 = arith.cmpi ne, %1, %c0_i32_0 : i32
    scf.if %2 {
      %c0 = arith.constant 0 : index
      %c0_3 = arith.constant 0 : index
      %6 = vector.load %arg2[%c0, %c0_3] : memref<16x128xbf16, #tpu.memory_space<vmem>>, vector<16x128xbf16>
      %7 = arith.extf %6 : vector<16x128xbf16> to vector<16x128xf32>
      %cst = arith.constant dense<0.000000e+00> : vector<16xf32>
      %8 = vector.multi_reduction <add>, %7, %cst [1] : vector<16x128xf32> to vector<16xf32>
      %9 = vector.shape_cast %8 : vector<16xf32> to vector<16x1xf32>
      %cst_4 = arith.constant 1.280000e+02 : f32
      %10 = vector.broadcast %cst_4 : f32 to vector<16x1xf32>
      %11 = arith.divf %9, %10 : vector<16x1xf32>
      %12 = vector.broadcast %11 : vector<16x1xf32> to vector<16x128xf32>
      %13 = arith.subf %7, %12 : vector<16x128xf32>
      %14 = arith.mulf %13, %13 : vector<16x128xf32>
      %cst_5 = arith.constant dense<0.000000e+00> : vector<16xf32>
      %15 = vector.multi_reduction <add>, %14, %cst_5 [1] : vector<16x128xf32> to vector<16xf32>
      %16 = vector.shape_cast %15 : vector<16xf32> to vector<16x1xf32>
      %cst_6 = arith.constant 1.280000e+02 : f32
      %17 = vector.broadcast %cst_6 : f32 to vector<16x1xf32>
      %18 = arith.divf %16, %17 : vector<16x1xf32>
      %19 = vector.broadcast %11 : vector<16x1xf32> to vector<16x128xf32>
      %20 = arith.subf %7, %19 : vector<16x128xf32>
      %cst_7 = arith.constant 9.99999974E-6 : f32
      %21 = vector.broadcast %cst_7 : f32 to vector<16x1xf32>
      %22 = arith.addf %18, %21 : vector<16x1xf32>
      %23 = math.rsqrt %22 : vector<16x1xf32>
      %24 = vector.broadcast %23 : vector<16x1xf32> to vector<16x128xf32>
      %25 = arith.mulf %20, %24 : vector<16x128xf32>
      %c0_8 = arith.constant 0 : index
      %c0_9 = arith.constant 0 : index
      %26 = vector.load %arg3[%c0_8, %c0_9] : memref<1x128xf32, #tpu.memory_space<vmem>>, vector<1x128xf32>
      %27 = vector.broadcast %26 : vector<1x128xf32> to vector<16x128xf32>
      %28 = arith.mulf %25, %27 : vector<16x128xf32>
      %c0_10 = arith.constant 0 : index
      %c0_11 = arith.constant 0 : index
      %29 = vector.load %arg4[%c0_10, %c0_11] : memref<1x128xf32, #tpu.memory_space<vmem>>, vector<1x128xf32>
      %30 = vector.broadcast %29 : vector<1x128xf32> to vector<16x128xf32>
      %31 = arith.addf %28, %30 : vector<16x128xf32>
      %32 = arith.truncf %31 : vector<16x128xf32> to vector<16x128xbf16>
      %c0_12 = arith.constant 0 : index
      %c0_13 = arith.constant 0 : index
      %33 = vector.load %arg8[%c0_12, %c0_13] : memref<16x128xbf16, #tpu.memory_space<vmem>>, vector<16x128xbf16>
      tpu.vector_store %arg8[%c0_12, %c0_13], %32 {strides = array<i32>} : memref<16x128xbf16, #tpu.memory_space<vmem>>, vector<16x128xbf16>,
      %c0_14 = arith.constant 0 : index
      %c0_15 = arith.constant 0 : index
      %34 = vector.load %arg5[%c0_14, %c0_15] : memref<128x384xbf16, #tpu.memory_space<vmem>>, vector<128x384xbf16>
      %cst_16 = arith.constant dense<0.000000e+00> : vector<16x384xf32>
      %35 = tpu.matmul %32, %34, %cst_16 {dimension_numbers = #tpu.dot_dimension_numbers<[1], [0], [0], [1], [0, 0, 1, 1], [], []>} : vector<16x128xbf16>, vector<128x384xbf16>, vector<16x384xf32> -> vector<16x384xf32>
      %c0_17 = arith.constant 0 : index
      %c0_18 = arith.constant 0 : index
      %36 = vector.load %arg6[%c0_17, %c0_18] : memref<1x384xf32, #tpu.memory_space<vmem>>, vector<1x384xf32>
      %37 = vector.broadcast %36 : vector<1x384xf32> to vector<16x384xf32>
      %38 = arith.addf %35, %37 : vector<16x384xf32>
      %39 = arith.truncf %38 : vector<16x384xf32> to vector<16x384xbf16>
      %c0_19 = arith.constant 0 : index
      %c0_20 = arith.constant 0 : index
      %40 = vector.load %arg7[%c0_19, %c0_20] : memref<16x384xbf16, #tpu.memory_space<vmem>>, vector<16x384xbf16>
      tpu.vector_store %arg7[%c0_19, %c0_20], %39 {strides = array<i32>} : memref<16x384xbf16, #tpu.memory_space<vmem>>, vector<16x384xbf16>,
    } else {
    }
    %c0_i32_1 = arith.constant 0 : i32
    %3 = arith.cmpi ne, %arg1, %c0_i32_1 : i32
    %4 = arith.extui %3 : i1 to i32
    %c0_i32_2 = arith.constant 0 : i32
    %5 = arith.cmpi ne, %4, %c0_i32_2 : i32
    scf.if %5 {
      %c0 = arith.constant 0 : index
      %c0_3 = arith.constant 0 : index
      %6 = vector.load %arg8[%c0, %c0_3] : memref<16x128xbf16, #tpu.memory_space<vmem>>, vector<16x128xbf16>
      %c0_4 = arith.constant 0 : index
      %c0_5 = arith.constant 0 : index
      %7 = vector.load %arg5[%c0_4, %c0_5] : memref<128x384xbf16, #tpu.memory_space<vmem>>, vector<128x384xbf16>
      %cst = arith.constant dense<0.000000e+00> : vector<16x384xf32>
      %8 = tpu.matmul %6, %7, %cst {dimension_numbers = #tpu.dot_dimension_numbers<[1], [0], [0], [1], [0, 0, 1, 1], [], []>} : vector<16x128xbf16>, vector<128x384xbf16>, vector<16x384xf32> -> vector<16x384xf32>
      %c0_6 = arith.constant 0 : index
      %c0_7 = arith.constant 0 : index
      %9 = vector.load %arg6[%c0_6, %c0_7] : memref<1x384xf32, #tpu.memory_space<vmem>>, vector<1x384xf32>
      %10 = vector.broadcast %9 : vector<1x384xf32> to vector<16x384xf32>
      %11 = arith.addf %8, %10 : vector<16x384xf32>
      %12 = arith.truncf %11 : vector<16x384xf32> to vector<16x384xbf16>
      %c0_8 = arith.constant 0 : index
      %c0_9 = arith.constant 0 : index
      %13 = vector.load %arg7[%c0_8, %c0_9] : memref<16x384xbf16, #tpu.memory_space<vmem>>, vector<16x384xbf16>
      tpu.vector_store %arg7[%c0_8, %c0_9], %12 {strides = array<i32>} : memref<16x384xbf16, #tpu.memory_space<vmem>>, vector<16x384xbf16>,
    } else {
    }
    return
  }
  func.func @transform_0(%arg0: i32, %arg1: i32) -> (i32, i32) {
    %c0_i32 = arith.constant 0 : i32
    %c0_i32_0 = arith.constant 0 : i32
    return %arg0, %c0_i32 : i32, i32
  }
  func.func @transform_1(%arg0: i32, %arg1: i32) -> (i32, i32) {
    %c0_i32 = arith.constant 0 : i32
    %c0_i32_0 = arith.constant 0 : i32
    %c0_i32_1 = arith.constant 0 : i32
    return %c0_i32, %c0_i32_0 : i32, i32
  }
  func.func @transform_2(%arg0: i32, %arg1: i32) -> (i32, i32) {
    %c0_i32 = arith.constant 0 : i32
    %c0_i32_0 = arith.constant 0 : i32
    %c0_i32_1 = arith.constant 0 : i32
    return %c0_i32, %c0_i32_0 : i32, i32
  }
  func.func @transform_3(%arg0: i32, %arg1: i32) -> (i32, i32) {
    %c0_i32 = arith.constant 0 : i32
    %c0_i32_0 = arith.constant 0 : i32
    return %c0_i32, %arg1 : i32, i32
  }
  func.func @transform_4(%arg0: i32, %arg1: i32) -> (i32, i32) {
    %c0_i32 = arith.constant 0 : i32
    %c0_i32_0 = arith.constant 0 : i32
    return %c0_i32, %arg1 : i32, i32
  }
  func.func @transform_5(%arg0: i32, %arg1: i32) -> (i32, i32) {
    %c0_i32 = arith.constant 0 : i32
    return %arg0, %arg1 : i32, i32
  }
}

</mosaic_0001>

<llo_original>
// kernel: tpu_custom_call.1
$region0: #{tpu_custom_call.1}
  #allocation0 [shape = 'u32[]', space=smem, size = 0x4, offset = 0x4, fixed_abs, tag = 'smem constant byte address 0x4 - core index']
  #allocation1 [shape = 'u32[144,128]{1,0:T(1,128)}', space=vmem, size = 0x12000, scoped, tag = 'internal scratch']
  #allocation2 [shape = 'bf16[16,128]{1,0:T(16,128)(2,1)}', space=vmem, size = 0x1000, scoped, tag = 'scratch operand']
  %s0 = inlined_call_operand.hbm [shape: bf16[16,128], index: 0, kind: input, shape index: {}]
  %s1 = inlined_call_operand.vmem [shape: f32[1,128], index: 1, kind: input, shape index: {}]
  %s2 = inlined_call_operand.vmem [shape: f32[1,128], index: 2, kind: input, shape index: {}]
  %s3 = inlined_call_operand.hbm [shape: bf16[128,384], index: 3, kind: input, shape index: {}]
  %s4 = inlined_call_operand.vmem [shape: f32[1,384], index: 4, kind: input, shape index: {}]
  %s5 = inlined_call_operand.hbm [shape: bf16[16,384], index: 5, kind: output, shape index: {}]
  %s6 = sld [smem:[#allocation0]]
  $region46: #{tpu_custom_call.1} parent=0
    _
  %s8 = ssub.s32 1, %s6
  %s9 = scalar_select 0, %s8, %s6
  $region1: #{tpu_custom_call.1} parent=0
    #allocation3 [shape = 'u8[4096]{0}', space=vmem, size = 0x1000, scoped, tag = 'input window, operand 0, single buffered']
    #allocation4 [shape = 's32[1]{0}', space=sflag, size = 0x4, scoped, tag = 'scoped memory for tpu_custom_call.1']
    #allocation5 [shape = 's32[1]{0}', space=sflag, size = 0x4, scoped, tag = 'scoped memory for tpu_custom_call.1']
    #allocation6 [shape = 'u8[98304]{0}', space=vmem, size = 0x18000, scoped, tag = 'input window, operand 3, single buffered']
    #allocation7 [shape = 's32[1]{0}', space=sflag, size = 0x4, scoped, tag = 'scoped memory for tpu_custom_call.1']
    #allocation8 [shape = 'u8[12288]{0}', space=vmem, size = 0x3000, scoped, tag = 'output window, operand 0, single buffered']
    %10 = vsyncpa [#allocation4], 0
    %11 = vsyncpa [#allocation7], 0
    %12 = vsyncpa [#allocation5], 0
    // Predicated region
    $region2: #{tpu_custom_call.1} parent=1 // pred_check
      _
    $region3: #{tpu_custom_call.1} parent=1 // pred_check_branch
      %14 = sbr.rel (0) target = $region5
    $region4: #{tpu_custom_call.1} parent=1 // pred_region
      %s16 = ssub.s32 128, 128
      %17 = vsyncadd [#allocation4], %s16
      %s18 = sshll.u32 [#allocation3], 4
      %s19 = int_to_ptr.vmem [resolvable:$true] %s18
      %24 = dma.hbm_to_vmem [thread:$0]  %s0, 128, %s19, [#allocation4], 64, 64, 4
    $region5: #{tpu_custom_call.1} parent=1 // pred_fallthru
      _
    // Predicated region
    $region6: #{tpu_custom_call.1} parent=1 // pred_check
      _
    $region7: #{tpu_custom_call.1} parent=1 // pred_check_branch
      %26 = sbr.rel (0) target = $region9
    $region8: #{tpu_custom_call.1} parent=1 // pred_region
      _
    $region9: #{tpu_custom_call.1} parent=1 // pred_fallthru
      _
    // Predicated region
    $region10: #{tpu_custom_call.1} parent=1 // pred_check
      _
    $region11: #{tpu_custom_call.1} parent=1 // pred_check_branch
      %28 = sbr.rel (0) target = $region13
    $region12: #{tpu_custom_call.1} parent=1 // pred_region
      _
    $region13: #{tpu_custom_call.1} parent=1 // pred_fallthru
      _
    // Predicated region
    $region14: #{tpu_custom_call.1} parent=1 // pred_check
      _
    $region15: #{tpu_custom_call.1} parent=1 // pred_check_branch
      %30 = sbr.rel (0) target = $region17
    $region16: #{tpu_custom_call.1} parent=1 // pred_region
      %s32 = ssub.s32 3072, 3072
      %33 = vsyncadd [#allocation7], %s32
      %s34 = sshll.u32 [#allocation6], 4
      %s35 = int_to_ptr.vmem [resolvable:$true] %s34
      %40 = dma.hbm_to_vmem [thread:$0]  %s3, 3072, %s35, [#allocation7], 192, 192, 12
    $region17: #{tpu_custom_call.1} parent=1 // pred_fallthru
      _
    // Predicated region
    $region18: #{tpu_custom_call.1} parent=1 // pred_check
      _
    $region19: #{tpu_custom_call.1} parent=1 // pred_check_branch
      %42 = sbr.rel (0) target = $region21
    $region20: #{tpu_custom_call.1} parent=1 // pred_region
      _
    $region21: #{tpu_custom_call.1} parent=1 // pred_fallthru
      _
    // Predicated region
    $region22: #{tpu_custom_call.1} parent=1 // pred_check
      _
    $region23: #{tpu_custom_call.1} parent=1 // pred_check_branch
      %44 = sbr.rel (0) target = $region25
    $region24: #{tpu_custom_call.1} parent=1 // pred_region
      %45 = dma.done [#allocation4], 128
    $region25: #{tpu_custom_call.1} parent=1 // pred_fallthru
      _
    // Predicated region
    $region26: #{tpu_custom_call.1} parent=1 // pred_check
      _
    $region27: #{tpu_custom_call.1} parent=1 // pred_check_branch
      %47 = sbr.rel (0) target = $region29
    $region28: #{tpu_custom_call.1} parent=1 // pred_region
      %48 = dma.done [#allocation7], 3072
    $region29: #{tpu_custom_call.1} parent=1 // pred_fallthru
      _
    %p50 = scmp.eq.s32.totalorder 0, 0
    // Predicated region
    $region30: #{tpu_custom_call.1} parent=1 // pred_check
      %p51 = pneg %p50
    $region31: #{tpu_custom_call.1} parent=1 // pred_check_branch
      %53 = sbr.rel (%p51) target = $region33
    $region32: #{tpu_custom_call.1} parent=1 // pred_region
      %v54 = vld [vmem:[#allocation3] sm:$0xf]
      %v55 = vld [vmem:[#allocation3 + $0x4] sm:$0xf]
      %v56 = vunpack.c.l.bf16 %v54
      %v57 = vunpack.c.l.bf16 %v55
      %58 = vadd.xlane.f32.xlu0 %v56
      %v59 = vpop.xlane.xlu0 %58
      %60 = vadd.xlane.f32.xlu0 %v57
      %v61 = vpop.xlane.xlu0 %60
      %v62 = vrcp.pop 128.0
      %v63 = vmul.f32 %v59, %v62
      %v64 = vmul.f32 %v61, %v62
      %v65 = vsub.f32 %v56, %v63
      %v66 = vsub.f32 %v57, %v64
      %v67 = vmul.f32 %v65, %v65
      %v68 = vmul.f32 %v66, %v66
      %69 = vadd.xlane.f32.xlu0 %v67
      %v70 = vpop.xlane.xlu0 %69
      %71 = vadd.xlane.f32.xlu0 %v68
      %v72 = vpop.xlane.xlu0 %71
      %v73 = vmul.f32 %v70, %v62
      %v74 = vmul.f32 %v72, %v62
      %v75 = vadd.f32 %v73, 1e-05
      %v76 = vadd.f32 %v74, 1e-05
      %v77 = vrsqrt.pop %v75
      %v78 = vrsqrt.pop %v76
      %v79 = vmul.f32 %v65, %v77
      %v80 = vmul.f32 %v66, %v78
      %v81 = vld [vmem:[%s1] sm:$0x1]
      %v83 = vlaneseq
      %v84 = vshrl.u32 %v83, 7
      %v85 = vsub.s32 0, %v84
      %v86 = vrot.slane %v81, %v85
      %v88 = vmul.f32 %v79, %v86
      %v89 = vmul.f32 %v80, %v86
      %v90 = vld [vmem:[%s2] sm:$0x1]
      %v92 = vlaneseq
      %v93 = vshrl.u32 %v92, 7
      %v94 = vsub.s32 0, %v93
      %v95 = vrot.slane %v90, %v94
      %v97 = vadd.f32 %v88, %v95
      %v98 = vadd.f32 %v89, %v95
      %v99 = vpack.c.bf16 %v98, %v97
      %100 = vst [vmem:[#allocation2] sm:$0xff] %v99
      %v101 = vld [vmem:[#allocation6] sm:$0xff]
      %v102 = vld [vmem:[#allocation6 + $0x8] sm:$0xf]
      %v103 = vld [vmem:[#allocation6 + $0xc] sm:$0xff]
      %v104 = vld [vmem:[#allocation6 + $0x14] sm:$0xf]
      %v105 = vld [vmem:[#allocation6 + $0x18] sm:$0xff]
      %v106 = vld [vmem:[#allocation6 + $0x20] sm:$0xf]
      %v107 = vld [vmem:[#allocation6 + $0x24] sm:$0xff]
      %v108 = vld [vmem:[#allocation6 + $0x2c] sm:$0xf]
      %v109 = vld [vmem:[#allocation6 + $0x30] sm:$0xff]
      %v110 = vld [vmem:[#allocation6 + $0x38] sm:$0xf]
      %v111 = vld [vmem:[#allocation6 + $0x3c] sm:$0xff]
      %v112 = vld [vmem:[#allocation6 + $0x44] sm:$0xf]
      %v113 = vld [vmem:[#allocation6 + $0x48] sm:$0xff]
      %v114 = vld [vmem:[#allocation6 + $0x50] sm:$0xf]
      %v115 = vld [vmem:[#allocation6 + $0x54] sm:$0xff]
      %v116 = vld [vmem:[#allocation6 + $0x5c] sm:$0xf]
      %v117 = vld [vmem:[#allocation6 + $0x60] sm:$0xff]
      %v118 = vld [vmem:[#allocation6 + $0x68] sm:$0xf]
      %v119 = vld [vmem:[#allocation6 + $0x6c] sm:$0xff]
      %v120 = vld [vmem:[#allocation6 + $0x74] sm:$0xf]
      %v121 = vld [vmem:[#allocation6 + $0x78] sm:$0xff]
      %v122 = vld [vmem:[#allocation6 + $0x80] sm:$0xf]
      %v123 = vld [vmem:[#allocation6 + $0x84] sm:$0xff]
      %v124 = vld [vmem:[#allocation6 + $0x8c] sm:$0xf]
      %v125 = vld [vmem:[#allocation6 + $0x90] sm:$0xff]
      %v126 = vld [vmem:[#allocation6 + $0x98] sm:$0xf]
      %v127 = vld [vmem:[#allocation6 + $0x9c] sm:$0xff]
      %v128 = vld [vmem:[#allocation6 + $0xa4] sm:$0xf]
      %v129 = vld [vmem:[#allocation6 + $0xa8] sm:$0xff]
      %v130 = vld [vmem:[#allocation6 + $0xb0] sm:$0xf]
      %v131 = vld [vmem:[#allocation6 + $0xb4] sm:$0xff]
      %v132 = vld [vmem:[#allocation6 + $0xbc] sm:$0xf]
      %v133 = vld [vmem:[%s4] sm:$0x7]
      %v135 = vlaneseq
      %v136 = vshrl.u32 %v135, 7
      %v137 = vsub.s32 0, %v136
      %v138 = vrot.slane %v133, %v137
      %v139 = vlaneseq
      %v140 = vshrl.u32 %v139, 7
      %v141 = vsub.s32 1, %v140
      %v142 = vrot.slane %v133, %v141
      %v143 = vlaneseq
      %v144 = vshrl.u32 %v143, 7
      %v145 = vsub.s32 2, %v144
      %v146 = vrot.slane %v133, %v145
      %v182 = vunpack.c.l.b16 %v101
      %v183 = vunpack.c.h.b16 %v101
      %v184 = vunpack.c.l.b16 %v102
      %v185 = vunpack.c.l.b16 %v103
      %v186 = vunpack.c.h.b16 %v103
      %v187 = vunpack.c.l.b16 %v104
      %v188 = vunpack.c.l.b16 %v105
      %v189 = vunpack.c.h.b16 %v105
      %v190 = vunpack.c.l.b16 %v106
      %v191 = vunpack.c.l.b16 %v107
      %v192 = vunpack.c.h.b16 %v107
      %v193 = vunpack.c.l.b16 %v108
      %v194 = vunpack.c.l.b16 %v109
      %v195 = vunpack.c.h.b16 %v109
      %v196 = vunpack.c.l.b16 %v110
      %v197 = vunpack.c.l.b16 %v111
      %v198 = vunpack.c.h.b16 %v111
      %v199 = vunpack.c.l.b16 %v112
      %v200 = vunpack.c.l.b16 %v113
      %v201 = vunpack.c.h.b16 %v113
      %v202 = vunpack.c.l.b16 %v114
      %v203 = vunpack.c.l.b16 %v115
      %v204 = vunpack.c.h.b16 %v115
      %v205 = vunpack.c.l.b16 %v116
      %v206 = vunpack.c.l.b16 %v117
      %v207 = vunpack.c.h.b16 %v117
      %v208 = vunpack.c.l.b16 %v118
      %v209 = vunpack.c.l.b16 %v119
      %v210 = vunpack.c.h.b16 %v119
      %v211 = vunpack.c.l.b16 %v120
      %v212 = vunpack.c.l.b16 %v121
      %v213 = vunpack.c.h.b16 %v121
      %v214 = vunpack.c.l.b16 %v122
      %v215 = vunpack.c.l.b16 %v123
      %v216 = vunpack.c.h.b16 %v123
      %v217 = vunpack.c.l.b16 %v124
      %v218 = vunpack.c.l.b16 %v125
      %v219 = vunpack.c.h.b16 %v125
      %v220 = vunpack.c.l.b16 %v126
      %v221 = vunpack.c.l.b16 %v127
      %v222 = vunpack.c.h.b16 %v127
      %v223 = vunpack.c.l.b16 %v128
      %v224 = vunpack.c.l.b16 %v129
      %v225 = vunpack.c.h.b16 %v129
      %v226 = vunpack.c.l.b16 %v130
      %v227 = vunpack.c.l.b16 %v131
      %v228 = vunpack.c.h.b16 %v131
      %v229 = vunpack.c.l.b16 %v132
      %v230 = vpack.c.b16 %v185, %v182
      %v231 = vpack.c.b16 %v186, %v183
      %v232 = vpack.c.b16 %v187, %v184
      %v233 = vpack.c.b16 %v191, %v188
      %v234 = vpack.c.b16 %v192, %v189
      %v235 = vpack.c.b16 %v193, %v190
      %v236 = vpack.c.b16 %v197, %v194
      %v237 = vpack.c.b16 %v198, %v195
      %v238 = vpack.c.b16 %v199, %v196
      %v239 = vpack.c.b16 %v203, %v200
      %v240 = vpack.c.b16 %v204, %v201
      %v241 = vpack.c.b16 %v205, %v202
      %v242 = vpack.c.b16 %v209, %v206
      %v243 = vpack.c.b16 %v210, %v207
      %v244 = vpack.c.b16 %v211, %v208
      %v245 = vpack.c.b16 %v215, %v212
      %v246 = vpack.c.b16 %v216, %v213
      %v247 = vpack.c.b16 %v217, %v214
      %v248 = vpack.c.b16 %v221, %v218
      %v249 = vpack.c.b16 %v222, %v219
      %v250 = vpack.c.b16 %v223, %v220
      %v251 = vpack.c.b16 %v227, %v224
      %v252 = vpack.c.b16 %v228, %v225
      %v253 = vpack.c.b16 %v229, %v226
      %278 = vmatprep.subr.bf16.mxu0 %v231
      %279 = vmatpush1.bf16.msra.mxu0 %v230
      %280 = vmatprep.subr.bf16.mxu0 %v234
      %281 = vmatpush1.bf16.msra.mxu0 %v233
      %282 = vmatprep.subr.bf16.mxu0 %v237
      %283 = vmatpush1.bf16.msra.mxu0 %v236
      %284 = vmatprep.subr.bf16.mxu0 %v240
      %285 = vmatpush1.bf16.msra.mxu0 %v239
      %286 = vmatprep.subr.bf16.mxu0 %v243
      %287 = vmatpush1.bf16.msra.mxu0 %v242
      %288 = vmatprep.subr.bf16.mxu0 %v246
      %289 = vmatpush1.bf16.msra.mxu0 %v245
      %290 = vmatprep.subr.bf16.mxu0 %v249
      %291 = vmatpush1.bf16.msra.mxu0 %v248
      %292 = vmatprep.subr.bf16.mxu0 %v252
      %293 = vmatpush1.bf16.msra.mxu0 %v251
      %294 = vmatprep.subr.bf16.mxu0 0
      %295 = vmatpush1.bf16.msra.mxu0 0
      %296 = vmatprep.subr.bf16.mxu0 0
      %297 = vmatpush1.bf16.msra.mxu0 0
      %298 = vmatprep.subr.bf16.mxu0 0
      %299 = vmatpush1.bf16.msra.mxu0 0
      %300 = vmatprep.subr.bf16.mxu0 0
      %301 = vmatpush1.bf16.msra.mxu0 0
      %302 = vmatprep.subr.bf16.mxu0 0
      %303 = vmatpush1.bf16.msra.mxu0 0
      %304 = vmatprep.subr.bf16.mxu0 0
      %305 = vmatpush1.bf16.msra.mxu0 0
      %306 = vmatprep.subr.bf16.mxu0 0
      %307 = vmatpush1.bf16.msra.mxu0 0
      %308 = vmatprep.subr.bf16.mxu0 0
      %309 = vmatpush1.bf16.msra.mxu0 0
      %310 = vmatprep.mubr.bf16.mxu0 0
      %311 = vmatmul.mubr.bf16.gmra.mrb[0].mxu0 %v99
      %v312 = vpop.f32.mrb[0].mxu0
      %v313 = vadd.f32 %v138, %v312
      %v314 = vpop.f32.mrb[0].mxu0
      %v315 = vadd.f32 %v142, %v314
      %v316 = vpop.f32.mrb[0].mxu0
      %v317 = vadd.f32 %v138, %v316
      %v318 = vpop.f32.mrb[0].mxu0
      %v319 = vadd.f32 %v142, %v318
      %320 = vdwg.mxu0
      %321 = vmatprep.subr.bf16.mxu0 0
      %322 = vmatpush1.bf16.msra.mxu0 %v232
      %323 = vmatprep.subr.bf16.mxu0 0
      %324 = vmatpush1.bf16.msra.mxu0 %v235
      %325 = vmatprep.subr.bf16.mxu0 0
      %326 = vmatpush1.bf16.msra.mxu0 %v238
      %327 = vmatprep.subr.bf16.mxu0 0
      %328 = vmatpush1.bf16.msra.mxu0 %v241
      %329 = vmatprep.subr.bf16.mxu0 0
      %330 = vmatpush1.bf16.msra.mxu0 %v244
      %331 = vmatprep.subr.bf16.mxu0 0
      %332 = vmatpush1.bf16.msra.mxu0 %v247
      %333 = vmatprep.subr.bf16.mxu0 0
      %334 = vmatpush1.bf16.msra.mxu0 %v250
      %335 = vmatprep.subr.bf16.mxu0 0
      %336 = vmatpush1.bf16.msra.mxu0 %v253
      %337 = vmatprep.subr.bf16.mxu0 0
      %338 = vmatpush1.bf16.msra.mxu0 0
      %339 = vmatprep.subr.bf16.mxu0 0
      %340 = vmatpush1.bf16.msra.mxu0 0
      %341 = vmatprep.subr.bf16.mxu0 0
      %342 = vmatpush1.bf16.msra.mxu0 0
      %343 = vmatprep.subr.bf16.mxu0 0
      %344 = vmatpush1.bf16.msra.mxu0 0
      %345 = vmatprep.subr.bf16.mxu0 0
      %346 = vmatpush1.bf16.msra.mxu0 0
      %347 = vmatprep.subr.bf16.mxu0 0
      %348 = vmatpush1.bf16.msra.mxu0 0
      %349 = vmatprep.subr.bf16.mxu0 0
      %350 = vmatpush1.bf16.msra.mxu0 0
      %351 = vmatprep.subr.bf16.mxu0 0
      %352 = vmatpush1.bf16.msra.mxu0 0
      %353 = vmatprep.mubr.bf16.mxu0 0
      %354 = vmatmul.mubr.bf16.gmra.mrb[0].mxu0 %v99
      %v355 = vpop.f32.mrb[0].mxu0
      %v356 = vadd.f32 %v146, %v355
      %v357 = vpop.f32.mrb[0].mxu0
      %v358 = vpop.f32.mrb[0].mxu0
      %v359 = vadd.f32 %v146, %v358
      %v360 = vpop.f32.mrb[0].mxu0
      %361 = vdwg.mxu0
      %v362 = vpack.c.bf16 %v317, %v313
      %v363 = vpack.c.bf16 %v319, %v315
      %v364 = vpack.c.bf16 %v359, %v356
      %v368 = vunpack.c.l.b16 %v362
      %v369 = vunpack.c.l.b16 %v363
      %v370 = vunpack.c.l.b16 %v364
      %v371 = vunpack.c.h.b16 %v362
      %v372 = vunpack.c.h.b16 %v363
      %v373 = vunpack.c.h.b16 %v364
      %v374 = vpack.c.b16 %v369, %v368
      %v375 = vpack.c.b16 %v370, %v370
      %v376 = vpack.c.b16 %v372, %v371
      %v377 = vpack.c.b16 %v373, %v373
      %382 = vst [vmem:[#allocation8] sm:$0xff] %v374
      %383 = vst [vmem:[#allocation8 + $0x8] sm:$0xf] %v375
      %384 = vst [vmem:[#allocation8 + $0xc] sm:$0xff] %v376
      %385 = vst [vmem:[#allocation8 + $0x14] sm:$0xf] %v377
    $region33: #{tpu_custom_call.1} parent=1 // pred_fallthru
      _
    %p386 = scmp.ne.s32.totalorder 0, 0
    // Predicated region
    $region34: #{tpu_custom_call.1} parent=1 // pred_check
      %p387 = pneg %p386
    $region35: #{tpu_custom_call.1} parent=1 // pred_check_branch
      %389 = sbr.rel (%p387) target = $region37
    $region36: #{tpu_custom_call.1} parent=1 // pred_region
      %v390 = vld [vmem:[#allocation2] sm:$0xff]
      %v391 = vld [vmem:[#allocation6] sm:$0xff]
      %v392 = vld [vmem:[#allocation6 + $0x8] sm:$0xf]
      %v393 = vld [vmem:[#allocation6 + $0xc] sm:$0xff]
      %v394 = vld [vmem:[#allocation6 + $0x14] sm:$0xf]
      %v395 = vld [vmem:[#allocation6 + $0x18] sm:$0xff]
      %v396 = vld [vmem:[#allocation6 + $0x20] sm:$0xf]
      %v397 = vld [vmem:[#allocation6 + $0x24] sm:$0xff]
      %v398 = vld [vmem:[#allocation6 + $0x2c] sm:$0xf]
      %v399 = vld [vmem:[#allocation6 + $0x30] sm:$0xff]
      %v400 = vld [vmem:[#allocation6 + $0x38] sm:$0xf]
      %v401 = vld [vmem:[#allocation6 + $0x3c] sm:$0xff]
      %v402 = vld [vmem:[#allocation6 + $0x44] sm:$0xf]
      %v403 = vld [vmem:[#allocation6 + $0x48] sm:$0xff]
      %v404 = vld [vmem:[#allocation6 + $0x50] sm:$0xf]
      %v405 = vld [vmem:[#allocation6 + $0x54] sm:$0xff]
      %v406 = vld [vmem:[#allocation6 + $0x5c] sm:$0xf]
      %v407 = vld [vmem:[#allocation6 + $0x60] sm:$0xff]
      %v408 = vld [vmem:[#allocation6 + $0x68] sm:$0xf]
      %v409 = vld [vmem:[#allocation6 + $0x6c] sm:$0xff]
      %v410 = vld [vmem:[#allocation6 + $0x74] sm:$0xf]
      %v411 = vld [vmem:[#allocation6 + $0x78] sm:$0xff]
      %v412 = vld [vmem:[#allocation6 + $0x80] sm:$0xf]
      %v413 = vld [vmem:[#allocation6 + $0x84] sm:$0xff]
      %v414 = vld [vmem:[#allocation6 + $0x8c] sm:$0xf]
      %v415 = vld [vmem:[#allocation6 + $0x90] sm:$0xff]
      %v416 = vld [vmem:[#allocation6 + $0x98] sm:$0xf]
      %v417 = vld [vmem:[#allocation6 + $0x9c] sm:$0xff]
      %v418 = vld [vmem:[#allocation6 + $0xa4] sm:$0xf]
      %v419 = vld [vmem:[#allocation6 + $0xa8] sm:$0xff]
      %v420 = vld [vmem:[#allocation6 + $0xb0] sm:$0xf]
      %v421 = vld [vmem:[#allocation6 + $0xb4] sm:$0xff]
      %v422 = vld [vmem:[#allocation6 + $0xbc] sm:$0xf]
      %v423 = vld [vmem:[%s4] sm:$0x7]
      %v425 = vlaneseq
      %v426 = vshrl.u32 %v425, 7
      %v427 = vsub.s32 0, %v426
      %v428 = vrot.slane %v423, %v427
      %v429 = vlaneseq
      %v430 = vshrl.u32 %v429, 7
      %v431 = vsub.s32 1, %v430
      %v432 = vrot.slane %v423, %v431
      %v433 = vlaneseq
      %v434 = vshrl.u32 %v433, 7
      %v435 = vsub.s32 2, %v434
      %v436 = vrot.slane %v423, %v435
      %v472 = vunpack.c.l.b16 %v391
      %v473 = vunpack.c.h.b16 %v391
      %v474 = vunpack.c.l.b16 %v392
      %v475 = vunpack.c.l.b16 %v393
      %v476 = vunpack.c.h.b16 %v393
      %v477 = vunpack.c.l.b16 %v394
      %v478 = vunpack.c.l.b16 %v395
      %v479 = vunpack.c.h.b16 %v395
      %v480 = vunpack.c.l.b16 %v396
      %v481 = vunpack.c.l.b16 %v397
      %v482 = vunpack.c.h.b16 %v397
      %v483 = vunpack.c.l.b16 %v398
      %v484 = vunpack.c.l.b16 %v399
      %v485 = vunpack.c.h.b16 %v399
      %v486 = vunpack.c.l.b16 %v400
      %v487 = vunpack.c.l.b16 %v401
      %v488 = vunpack.c.h.b16 %v401
      %v489 = vunpack.c.l.b16 %v402
      %v490 = vunpack.c.l.b16 %v403
      %v491 = vunpack.c.h.b16 %v403
      %v492 = vunpack.c.l.b16 %v404
      %v493 = vunpack.c.l.b16 %v405
      %v494 = vunpack.c.h.b16 %v405
      %v495 = vunpack.c.l.b16 %v406
      %v496 = vunpack.c.l.b16 %v407
      %v497 = vunpack.c.h.b16 %v407
      %v498 = vunpack.c.l.b16 %v408
      %v499 = vunpack.c.l.b16 %v409
      %v500 = vunpack.c.h.b16 %v409
      %v501 = vunpack.c.l.b16 %v410
      %v502 = vunpack.c.l.b16 %v411
      %v503 = vunpack.c.h.b16 %v411
      %v504 = vunpack.c.l.b16 %v412
      %v505 = vunpack.c.l.b16 %v413
      %v506 = vunpack.c.h.b16 %v413
      %v507 = vunpack.c.l.b16 %v414
      %v508 = vunpack.c.l.b16 %v415
      %v509 = vunpack.c.h.b16 %v415
      %v510 = vunpack.c.l.b16 %v416
      %v511 = vunpack.c.l.b16 %v417
      %v512 = vunpack.c.h.b16 %v417
      %v513 = vunpack.c.l.b16 %v418
      %v514 = vunpack.c.l.b16 %v419
      %v515 = vunpack.c.h.b16 %v419
      %v516 = vunpack.c.l.b16 %v420
      %v517 = vunpack.c.l.b16 %v421
      %v518 = vunpack.c.h.b16 %v421
      %v519 = vunpack.c.l.b16 %v422
      %v520 = vpack.c.b16 %v475, %v472
      %v521 = vpack.c.b16 %v476, %v473
      %v522 = vpack.c.b16 %v477, %v474
      %v523 = vpack.c.b16 %v481, %v478
      %v524 = vpack.c.b16 %v482, %v479
      %v525 = vpack.c.b16 %v483, %v480
      %v526 = vpack.c.b16 %v487, %v484
      %v527 = vpack.c.b16 %v488, %v485
      %v528 = vpack.c.b16 %v489, %v486
      %v529 = vpack.c.b16 %v493, %v490
      %v530 = vpack.c.b16 %v494, %v491
      %v531 = vpack.c.b16 %v495, %v492
      %v532 = vpack.c.b16 %v499, %v496
      %v533 = vpack.c.b16 %v500, %v497
      %v534 = vpack.c.b16 %v501, %v498
      %v535 = vpack.c.b16 %v505, %v502
      %v536 = vpack.c.b16 %v506, %v503
      %v537 = vpack.c.b16 %v507, %v504
      %v538 = vpack.c.b16 %v511, %v508
      %v539 = vpack.c.b16 %v512, %v509
      %v540 = vpack.c.b16 %v513, %v510
      %v541 = vpack.c.b16 %v517, %v514
      %v542 = vpack.c.b16 %v518, %v515
      %v543 = vpack.c.b16 %v519, %v516
      %568 = vmatprep.subr.bf16.mxu0 %v521
      %569 = vmatpush1.bf16.msra.mxu0 %v520
      %570 = vmatprep.subr.bf16.mxu0 %v524
      %571 = vmatpush1.bf16.msra.mxu0 %v523
      %572 = vmatprep.subr.bf16.mxu0 %v527
      %573 = vmatpush1.bf16.msra.mxu0 %v526
      %574 = vmatprep.subr.bf16.mxu0 %v530
      %575 = vmatpush1.bf16.msra.mxu0 %v529
      %576 = vmatprep.subr.bf16.mxu0 %v533
      %577 = vmatpush1.bf16.msra.mxu0 %v532
      %578 = vmatprep.subr.bf16.mxu0 %v536
      %579 = vmatpush1.bf16.msra.mxu0 %v535
      %580 = vmatprep.subr.bf16.mxu0 %v539
      %581 = vmatpush1.bf16.msra.mxu0 %v538
      %582 = vmatprep.subr.bf16.mxu0 %v542
      %583 = vmatpush1.bf16.msra.mxu0 %v541
      %584 = vmatprep.subr.bf16.mxu0 0
      %585 = vmatpush1.bf16.msra.mxu0 0
      %586 = vmatprep.subr.bf16.mxu0 0
      %587 = vmatpush1.bf16.msra.mxu0 0
      %588 = vmatprep.subr.bf16.mxu0 0
      %589 = vmatpush1.bf16.msra.mxu0 0
      %590 = vmatprep.subr.bf16.mxu0 0
      %591 = vmatpush1.bf16.msra.mxu0 0
      %592 = vmatprep.subr.bf16.mxu0 0
      %593 = vmatpush1.bf16.msra.mxu0 0
      %594 = vmatprep.subr.bf16.mxu0 0
      %595 = vmatpush1.bf16.msra.mxu0 0
      %596 = vmatprep.subr.bf16.mxu0 0
      %597 = vmatpush1.bf16.msra.mxu0 0
      %598 = vmatprep.subr.bf16.mxu0 0
      %599 = vmatpush1.bf16.msra.mxu0 0
      %600 = vmatprep.mubr.bf16.mxu0 0
      %601 = vmatmul.mubr.bf16.gmra.mrb[0].mxu0 %v390
      %v602 = vpop.f32.mrb[0].mxu0
      %v603 = vadd.f32 %v428, %v602
      %v604 = vpop.f32.mrb[0].mxu0
      %v605 = vadd.f32 %v432, %v604
      %v606 = vpop.f32.mrb[0].mxu0
      %v607 = vadd.f32 %v428, %v606
      %v608 = vpop.f32.mrb[0].mxu0
      %v609 = vadd.f32 %v432, %v608
      %610 = vdwg.mxu0
      %611 = vmatprep.subr.bf16.mxu0 0
      %612 = vmatpush1.bf16.msra.mxu0 %v522
      %613 = vmatprep.subr.bf16.mxu0 0
      %614 = vmatpush1.bf16.msra.mxu0 %v525
      %615 = vmatprep.subr.bf16.mxu0 0
      %616 = vmatpush1.bf16.msra.mxu0 %v528
      %617 = vmatprep.subr.bf16.mxu0 0
      %618 = vmatpush1.bf16.msra.mxu0 %v531
      %619 = vmatprep.subr.bf16.mxu0 0
      %620 = vmatpush1.bf16.msra.mxu0 %v534
      %621 = vmatprep.subr.bf16.mxu0 0
      %622 = vmatpush1.bf16.msra.mxu0 %v537
      %623 = vmatprep.subr.bf16.mxu0 0
      %624 = vmatpush1.bf16.msra.mxu0 %v540
      %625 = vmatprep.subr.bf16.mxu0 0
      %626 = vmatpush1.bf16.msra.mxu0 %v543
      %627 = vmatprep.subr.bf16.mxu0 0
      %628 = vmatpush1.bf16.msra.mxu0 0
      %629 = vmatprep.subr.bf16.mxu0 0
      %630 = vmatpush1.bf16.msra.mxu0 0
      %631 = vmatprep.subr.bf16.mxu0 0
      %632 = vmatpush1.bf16.msra.mxu0 0
      %633 = vmatprep.subr.bf16.mxu0 0
      %634 = vmatpush1.bf16.msra.mxu0 0
      %635 = vmatprep.subr.bf16.mxu0 0
      %636 = vmatpush1.bf16.msra.mxu0 0
      %637 = vmatprep.subr.bf16.mxu0 0
      %638 = vmatpush1.bf16.msra.mxu0 0
      %639 = vmatprep.subr.bf16.mxu0 0
      %640 = vmatpush1.bf16.msra.mxu0 0
      %641 = vmatprep.subr.bf16.mxu0 0
      %642 = vmatpush1.bf16.msra.mxu0 0
      %643 = vmatprep.mubr.bf16.mxu0 0
      %644 = vmatmul.mubr.bf16.gmra.mrb[0].mxu0 %v390
      %v645 = vpop.f32.mrb[0].mxu0
      %v646 = vadd.f32 %v436, %v645
      %v647 = vpop.f32.mrb[0].mxu0
      %v648 = vpop.f32.mrb[0].mxu0
      %v649 = vadd.f32 %v436, %v648
      %v650 = vpop.f32.mrb[0].mxu0
      %651 = vdwg.mxu0
      %v652 = vpack.c.bf16 %v607, %v603
      %v653 = vpack.c.bf16 %v609, %v605
      %v654 = vpack.c.bf16 %v649, %v646
      %v658 = vunpack.c.l.b16 %v652
      %v659 = vunpack.c.l.b16 %v653
      %v660 = vunpack.c.l.b16 %v654
      %v661 = vunpack.c.h.b16 %v652
      %v662 = vunpack.c.h.b16 %v653
      %v663 = vunpack.c.h.b16 %v654
      %v664 = vpack.c.b16 %v659, %v658
      %v665 = vpack.c.b16 %v660, %v660
      %v666 = vpack.c.b16 %v662, %v661
      %v667 = vpack.c.b16 %v663, %v663
      %672 = vst [vmem:[#allocation8] sm:$0xff] %v664
      %673 = vst [vmem:[#allocation8 + $0x8] sm:$0xf] %v665
      %674 = vst [vmem:[#allocation8 + $0xc] sm:$0xff] %v666
      %675 = vst [vmem:[#allocation8 + $0x14] sm:$0xf] %v667
    $region37: #{tpu_custom_call.1} parent=1 // pred_fallthru
      _
    // Predicated region
    $region38: #{tpu_custom_call.1} parent=1 // pred_check
      _
    $region39: #{tpu_custom_call.1} parent=1 // pred_check_branch
      %677 = sbr.rel (0) target = $region41
    $region40: #{tpu_custom_call.1} parent=1 // pred_region
      %s679 = ssub.s32 384, 384
      %680 = vsyncadd [#allocation5], %s679
      %s681 = sshll.u32 [#allocation8], 4
      %s682 = int_to_ptr.vmem [resolvable:$true] %s681
      %687 = dma.vmem_to_hbm [thread:$0]  %s682, 384, %s5, [#allocation5], 192, 192, 12
    $region41: #{tpu_custom_call.1} parent=1 // pred_fallthru
      _
    // Predicated region
    $region42: #{tpu_custom_call.1} parent=1 // pred_check
      _
    $region43: #{tpu_custom_call.1} parent=1 // pred_check_branch
      %689 = sbr.rel (0) target = $region45
    $region44: #{tpu_custom_call.1} parent=1 // pred_region
      %690 = dma.done [#allocation5], 384
    $region45: #{tpu_custom_call.1} parent=1 // pred_fallthru
      _
    %691 = vsyncpa [#allocation4], 1
    %692 = vsyncpa [#allocation7], 1
    %693 = vsyncpa [#allocation5], 1

</llo_original>
